<compile_context>
chip_gen: v5e
topology: v5e:2x2
jax: 0.10.0
libtpu: 0.0.40
codegen_flags: <defaults>
</compile_context>

<pallas_src>
import functools

import jax
import jax.numpy as jnp
from jax.experimental import pallas as pl
from jax.experimental.pallas import tpu as pltpu


def _sbb_kernel(x_ref, w1_ref, b1_ref, w2_ref, b2_ref, w3_ref, b3_ref,
                w4_ref, b4_ref, o_ref, *, H, W):
    Nb, Cin, HW = x_ref.shape
    Cm = w1_ref.shape[0]
    f32 = jnp.float32

    # Boundary masks for the rolled tap contributions (hoisted once;
    # shape (Cm, HW), pixels on lanes).
    pix = jax.lax.broadcasted_iota(jnp.int32, (Cm, HW), 1)
    col = pix % W
    not_row_top = pix >= W                  # h > 0
    not_row_bot = pix < (H - 1) * W         # h < H - 1
    not_col_left = col != 0                 # w > 0
    not_col_right = col != (W - 1)          # w < W - 1

    for b in range(Nb):                     # Nb is small & static
        x = x_ref[b]                                             # (Cin, HW)

        # ---- Conv 1x1 (Cin -> Cm) + bias + ReLU ------------------------
        h1 = jnp.maximum(
            jnp.dot(w1_ref[...], x, preferred_element_type=f32) + b1_ref[...],
            0.0)                                                 # (Cm, HW)

        # ---- Conv (3,1), padding (1,0) + ReLU --------------------------
        # out[:, h, :] = sum_kh W2[kh] @ h1[:, h + kh - 1, :] (zero-padded).
        # Compute each tap on the unshifted h1, roll the result along the
        # flattened pixel axis by +-W, and zero the wrapped boundary row.
        y_m1 = jnp.dot(w2_ref[0], h1, preferred_element_type=f32)   # tap h-1
        y_00 = jnp.dot(w2_ref[1], h1, preferred_element_type=f32)   # tap h
        y_p1 = jnp.dot(w2_ref[2], h1, preferred_element_type=f32)   # tap h+1
        acc = y_00 + b2_ref[...]
        acc = acc + jnp.where(not_row_top, pltpu.roll(y_m1, W, 1), 0.0)
        acc = acc + jnp.where(not_row_bot, pltpu.roll(y_p1, HW - W, 1), 0.0)
        h2 = jnp.maximum(acc, 0.0)                               # (Cm, HW)

        # ---- Conv (1,3), padding (0,1) + ReLU --------------------------
        z_m1 = jnp.dot(w3_ref[0], h2, preferred_element_type=f32)   # tap w-1
        z_00 = jnp.dot(w3_ref[1], h2, preferred_element_type=f32)   # tap w
        z_p1 = jnp.dot(w3_ref[2], h2, preferred_element_type=f32)   # tap w+1
        acc = z_00 + b3_ref[...]
        acc = acc + jnp.where(not_col_left, pltpu.roll(z_m1, 1, 1), 0.0)
        acc = acc + jnp.where(not_col_right, pltpu.roll(z_p1, HW - 1, 1), 0.0)
        h3 = jnp.maximum(acc, 0.0)                               # (Cm, HW)

        # ---- Conv 1x1 (Cm -> Cout), no activation ----------------------
        out = jnp.dot(w4_ref[...], h3, preferred_element_type=f32) + b4_ref[...]
        o_ref[b] = out.astype(o_ref.dtype)                       # (Cout, HW)


def small_basic_block_forward(x_nchw, params, *, batch_block=1):
    """Forward pass. x_nchw: (N, Cin, H, W) float32. Returns (N, Cout, H, W)."""
    (w1_t, b1), (w2_t, b2), (w3_t, b3), (w4_t, b4) = params
    N, Cin, H, W = x_nchw.shape
    Cm = w1_t.shape[0]
    Cout = w4_t.shape[0]
    HW = H * W

    Nb = batch_block
    assert N % Nb == 0, "batch_block must divide N"

    # NCHW -> (N, C, H*W): a pure reshape, no transpose / extra HBM round trip.
    x = x_nchw.reshape(N, Cin, HW)

    # PyTorch OIHW conv weights -> (C_out, C_in) matmul layouts (left-multiply).
    w1 = w1_t[:, :, 0, 0]                                   # (Cm, Cin)
    w2 = jnp.transpose(w2_t[:, :, :, 0], (2, 0, 1))         # (3, Cm, Cm) [kh,o,i]
    w3 = jnp.transpose(w3_t[:, :, 0, :], (2, 0, 1))         # (3, Cm, Cm) [kw,o,i]
    w4 = w4_t[:, :, 0, 0]                                   # (Cout, Cm)
    b1c, b2c, b3c, b4c = (b.reshape(-1, 1) for b in (b1, b2, b3, b4))

    full = lambda a: pl.BlockSpec(a.shape, lambda n: (0,) * a.ndim)

    out = pl.pallas_call(
        functools.partial(_sbb_kernel, H=H, W=W),
        out_shape=jax.ShapeDtypeStruct((N, Cout, HW), x_nchw.dtype),
        grid=(N // Nb,),
        in_specs=[
            pl.BlockSpec((Nb, Cin, HW), lambda n: (n, 0, 0)),
            full(w1), full(b1c),
            full(w2), full(b2c),
            full(w3), full(b3c),
            full(w4), full(b4c),
        ],
        out_specs=pl.BlockSpec((Nb, Cout, HW), lambda n: (n, 0, 0)),
        compiler_params=pltpu.CompilerParams(
            dimension_semantics=("parallel",)),
    )(x, w1, b1c, w2, b2c, w3, b3c, w4, b4c)

    # (N, Cout, H*W) -> NCHW: pure reshape.
    return out.reshape(N, Cout, H, W)


def init_params(key, ch_in, ch_out):
    """Deterministic init mirroring the PyTorch layer shapes (OIHW weights + bias)."""
    cm = ch_out // 4
    shapes = [
        ((cm, ch_in, 1, 1), (cm,)),       # Conv2d(ch_in, ch_out//4, 1)
        ((cm, cm, 3, 1), (cm,)),          # Conv2d(cm, cm, (3,1), padding=(1,0))
        ((cm, cm, 1, 3), (cm,)),          # Conv2d(cm, cm, (1,3), padding=(0,1))
        ((ch_out, cm, 1, 1), (ch_out,)),  # Conv2d(cm, ch_out, 1)
    ]
    params = []
    for wshape, bshape in shapes:
        key, kw, kb = jax.random.split(key, 3)
        fan_in = wshape[1] * wshape[2] * wshape[3]
        bound = 1.0 / jnp.sqrt(fan_in)
        w = jax.random.uniform(kw, wshape, jnp.float32, -bound, bound)
        b = jax.random.uniform(kb, bshape, jnp.float32, -bound, bound)
        params.append((w, b))
    return params


def _reference_forward(x, params):
    """Pure-JAX (XLA conv) reference, NCHW, matching PyTorch semantics."""
    def conv(h, w, b, pad_h, pad_w):
        y = jax.lax.conv_general_dilated(
            h, w, window_strides=(1, 1),
            padding=[(pad_h, pad_h), (pad_w, pad_w)],
            dimension_numbers=("NCHW", "OIHW", "NCHW"))
        return y + b[None, :, None, None]

    (w1, b1), (w2, b2), (w3, b3), (w4, b4) = params
    h = jax.nn.relu(conv(x, w1, b1, 0, 0))
    h = jax.nn.relu(conv(h, w2, b2, 1, 0))
    h = jax.nn.relu(conv(h, w3, b3, 0, 1))
    return conv(h, w4, b4, 0, 0)


if __name__ == "__main__":
    key = jax.random.PRNGKey(0)
    k_x, k_p = jax.random.split(key)

    N, CH_IN, CH_OUT, H, W = 2, 4, 32, 16, 16
    x = jax.random.normal(k_x, (N, CH_IN, H, W), jnp.float32)
    params = init_params(k_p, CH_IN, CH_OUT)

    out = small_basic_block_forward(x, params)
    out = jax.block_until_ready(out)

    ref = jax.block_until_ready(_reference_forward(x, params))
    assert out.shape == (N, CH_OUT, H, W), out.shape
    assert jnp.allclose(out, ref, atol=1e-4, rtol=1e-4), float(jnp.max(jnp.abs(out - ref)))

    print("KERNEL_OK")
</pallas_src>

<mosaic_0001>
module attributes {stable_mosaic.version = 11 : i64} {
  func.func @_sbb_kernel(%arg0: i32, %arg1: memref<1x4x256xf32, #tpu.memory_space<vmem>>, %arg2: memref<8x4xf32, #tpu.memory_space<vmem>>, %arg3: memref<8x1xf32, #tpu.memory_space<vmem>>, %arg4: memref<3x8x8xf32, #tpu.memory_space<vmem>>, %arg5: memref<8x1xf32, #tpu.memory_space<vmem>>, %arg6: memref<3x8x8xf32, #tpu.memory_space<vmem>>, %arg7: memref<8x1xf32, #tpu.memory_space<vmem>>, %arg8: memref<32x8xf32, #tpu.memory_space<vmem>>, %arg9: memref<32x1xf32, #tpu.memory_space<vmem>>, %arg10: memref<1x32x256xf32, #tpu.memory_space<vmem>>) attributes {dimension_semantics = [#tpu.dimension_semantics<parallel>], iteration_bounds = array<i64: 2>, scalar_prefetch = 0 : i64, scratch_operands = 0 : i64, tpu.core_type = #tpu.core_type<tc>, window_params = [{transform_indices = @transform_0, window_bounds = array<i64: 1, 4, 256>}, {pipeline_mode = #tpu.pipeline_mode<synchronous>, transform_indices = @transform_1, window_bounds = array<i64: 8, 4>}, {pipeline_mode = #tpu.pipeline_mode<synchronous>, transform_indices = @transform_2, window_bounds = array<i64: 8, 1>}, {pipeline_mode = #tpu.pipeline_mode<synchronous>, transform_indices = @transform_3, window_bounds = array<i64: 3, 8, 8>}, {pipeline_mode = #tpu.pipeline_mode<synchronous>, transform_indices = @transform_4, window_bounds = array<i64: 8, 1>}, {pipeline_mode = #tpu.pipeline_mode<synchronous>, transform_indices = @transform_5, window_bounds = array<i64: 3, 8, 8>}, {pipeline_mode = #tpu.pipeline_mode<synchronous>, transform_indices = @transform_6, window_bounds = array<i64: 8, 1>}, {pipeline_mode = #tpu.pipeline_mode<synchronous>, transform_indices = @transform_7, window_bounds = array<i64: 32, 8>}, {pipeline_mode = #tpu.pipeline_mode<synchronous>, transform_indices = @transform_8, window_bounds = array<i64: 32, 1>}, {transform_indices = @transform_9, window_bounds = array<i64: 1, 32, 256>}]} {
    %0 = tpu.iota {dimensions = array<i32: 1>} : vector<8x256xi32>
    %c16_i32 = arith.constant 16 : i32
    %c0_i32 = arith.constant 0 : i32
    %1 = arith.cmpi eq, %c16_i32, %c0_i32 : i32
    %c1_i32 = arith.constant 1 : i32
    %2 = arith.select %1, %c1_i32, %c16_i32 : i32
    %3 = vector.broadcast %2 : i32 to vector<8x256xi32>
    %4 = arith.remsi %0, %3 : vector<8x256xi32>
    %c0_i32_0 = arith.constant 0 : i32
    %5 = vector.broadcast %c0_i32_0 : i32 to vector<8x256xi32>
    %6 = arith.cmpi ne, %4, %5 : vector<8x256xi32>
    %c0_i32_1 = arith.constant 0 : i32
    %7 = vector.broadcast %c0_i32_1 : i32 to vector<8x256xi32>
    %8 = arith.cmpi slt, %4, %7 : vector<8x256xi32>
    %c0_i32_2 = arith.constant 0 : i32
    %9 = arith.cmpi slt, %2, %c0_i32_2 : i32
    %10 = vector.broadcast %9 : i1 to vector<8x256xi1>
    %11 = vector.broadcast %10 : vector<8x256xi1> to vector<8x256xi1>
    %12 = arith.xori %8, %11 : vector<8x256xi1>
    %13 = arith.andi %12, %6 : vector<8x256xi1>
    %14 = vector.broadcast %2 : i32 to vector<8x256xi32>
    %15 = arith.addi %4, %14 : vector<8x256xi32>
    %16 = arith.select %13, %15, %4 : vector<8x256xi1>, vector<8x256xi32>
    %c16_i32_3 = arith.constant 16 : i32
    %17 = vector.broadcast %c16_i32_3 : i32 to vector<8x256xi32>
    %18 = arith.cmpi sge, %0, %17 : vector<8x256xi32>
    %c240_i32 = arith.constant 240 : i32
    %19 = vector.broadcast %c240_i32 : i32 to vector<8x256xi32>
    %20 = arith.cmpi slt, %0, %19 : vector<8x256xi32>
    %c0_i32_4 = arith.constant 0 : i32
    %21 = vector.broadcast %c0_i32_4 : i32 to vector<8x256xi32>
    %22 = arith.cmpi ne, %16, %21 : vector<8x256xi32>
    %c15_i32 = arith.constant 15 : i32
    %23 = vector.broadcast %c15_i32 : i32 to vector<8x256xi32>
    %24 = arith.cmpi ne, %16, %23 : vector<8x256xi32>
    %c0 = arith.constant 0 : index
    %c0_5 = arith.constant 0 : index
    %c0_6 = arith.constant 0 : index
    %25 = vector.load %arg1[%c0, %c0_5, %c0_6] : memref<1x4x256xf32, #tpu.memory_space<vmem>>, vector<1x4x256xf32>
    %26 = vector.shape_cast %25 : vector<1x4x256xf32> to vector<4x256xf32>
    %c0_7 = arith.constant 0 : index
    %c0_8 = arith.constant 0 : index
    %27 = vector.load %arg2[%c0_7, %c0_8] : memref<8x4xf32, #tpu.memory_space<vmem>>, vector<8x4xf32>
    %cst = arith.constant dense<0.000000e+00> : vector<8x256xf32>
    %28 = tpu.matmul %27, %26, %cst {dimension_numbers = #tpu.dot_dimension_numbers<[1], [0], [0], [1], [0, 0, 1, 1], [], []>} : vector<8x4xf32>, vector<4x256xf32>, vector<8x256xf32> -> vector<8x256xf32>
    %c0_9 = arith.constant 0 : index
    %c0_10 = arith.constant 0 : index
    %29 = vector.load %arg3[%c0_9, %c0_10] : memref<8x1xf32, #tpu.memory_space<vmem>>, vector<8x1xf32>
    %30 = vector.broadcast %29 : vector<8x1xf32> to vector<8x256xf32>
    %31 = arith.addf %28, %30 : vector<8x256xf32>
    %cst_11 = arith.constant 0.000000e+00 : f32
    %32 = vector.broadcast %cst_11 : f32 to vector<8x256xf32>
    %33 = arith.maximumf %31, %32 : vector<8x256xf32>
    %c0_12 = arith.constant 0 : index
    %c0_13 = arith.constant 0 : index
    %c0_14 = arith.constant 0 : index
    %34 = vector.load %arg4[%c0_12, %c0_13, %c0_14] : memref<3x8x8xf32, #tpu.memory_space<vmem>>, vector<1x8x8xf32>
    %35 = vector.shape_cast %34 : vector<1x8x8xf32> to vector<8x8xf32>
    %cst_15 = arith.constant dense<0.000000e+00> : vector<8x256xf32>
    %36 = tpu.matmul %35, %33, %cst_15 {dimension_numbers = #tpu.dot_dimension_numbers<[1], [0], [0], [1], [0, 0, 1, 1], [], []>} : vector<8x8xf32>, vector<8x256xf32>, vector<8x256xf32> -> vector<8x256xf32>
    %c1 = arith.constant 1 : index
    %c0_16 = arith.constant 0 : index
    %c0_17 = arith.constant 0 : index
    %37 = vector.load %arg4[%c1, %c0_16, %c0_17] : memref<3x8x8xf32, #tpu.memory_space<vmem>>, vector<1x8x8xf32>
    %38 = vector.shape_cast %37 : vector<1x8x8xf32> to vector<8x8xf32>
    %cst_18 = arith.constant dense<0.000000e+00> : vector<8x256xf32>
    %39 = tpu.matmul %38, %33, %cst_18 {dimension_numbers = #tpu.dot_dimension_numbers<[1], [0], [0], [1], [0, 0, 1, 1], [], []>} : vector<8x8xf32>, vector<8x256xf32>, vector<8x256xf32> -> vector<8x256xf32>
    %c2 = arith.constant 2 : index
    %c0_19 = arith.constant 0 : index
    %c0_20 = arith.constant 0 : index
    %40 = vector.load %arg4[%c2, %c0_19, %c0_20] : memref<3x8x8xf32, #tpu.memory_space<vmem>>, vector<1x8x8xf32>
    %41 = vector.shape_cast %40 : vector<1x8x8xf32> to vector<8x8xf32>
    %cst_21 = arith.constant dense<0.000000e+00> : vector<8x256xf32>
    %42 = tpu.matmul %41, %33, %cst_21 {dimension_numbers = #tpu.dot_dimension_numbers<[1], [0], [0], [1], [0, 0, 1, 1], [], []>} : vector<8x8xf32>, vector<8x256xf32>, vector<8x256xf32> -> vector<8x256xf32>
    %c0_22 = arith.constant 0 : index
    %c0_23 = arith.constant 0 : index
    %43 = vector.load %arg5[%c0_22, %c0_23] : memref<8x1xf32, #tpu.memory_space<vmem>>, vector<8x1xf32>
    %44 = vector.broadcast %43 : vector<8x1xf32> to vector<8x256xf32>
    %45 = arith.addf %39, %44 : vector<8x256xf32>
    %c16_i32_24 = arith.constant 16 : i32
    %46 = tpu.dynamic_rotate %36 by %c16_i32_24 dim 1 : vector<8x256xf32>, i32 -> vector<8x256xf32>
    %cst_25 = arith.constant 0.000000e+00 : f32
    %47 = vector.broadcast %cst_25 : f32 to vector<8x256xf32>
    %48 = arith.select %18, %46, %47 : vector<8x256xi1>, vector<8x256xf32>
    %49 = arith.addf %45, %48 : vector<8x256xf32>
    %c240_i32_26 = arith.constant 240 : i32
    %50 = tpu.dynamic_rotate %42 by %c240_i32_26 dim 1 : vector<8x256xf32>, i32 -> vector<8x256xf32>
    %cst_27 = arith.constant 0.000000e+00 : f32
    %51 = vector.broadcast %cst_27 : f32 to vector<8x256xf32>
    %52 = arith.select %20, %50, %51 : vector<8x256xi1>, vector<8x256xf32>
    %53 = arith.addf %49, %52 : vector<8x256xf32>
    %cst_28 = arith.constant 0.000000e+00 : f32
    %54 = vector.broadcast %cst_28 : f32 to vector<8x256xf32>
    %55 = arith.maximumf %53, %54 : vector<8x256xf32>
    %c0_29 = arith.constant 0 : index
    %c0_30 = arith.constant 0 : index
    %c0_31 = arith.constant 0 : index
    %56 = vector.load %arg6[%c0_29, %c0_30, %c0_31] : memref<3x8x8xf32, #tpu.memory_space<vmem>>, vector<1x8x8xf32>
    %57 = vector.shape_cast %56 : vector<1x8x8xf32> to vector<8x8xf32>
    %cst_32 = arith.constant dense<0.000000e+00> : vector<8x256xf32>
    %58 = tpu.matmul %57, %55, %cst_32 {dimension_numbers = #tpu.dot_dimension_numbers<[1], [0], [0], [1], [0, 0, 1, 1], [], []>} : vector<8x8xf32>, vector<8x256xf32>, vector<8x256xf32> -> vector<8x256xf32>
    %c1_33 = arith.constant 1 : index
    %c0_34 = arith.constant 0 : index
    %c0_35 = arith.constant 0 : index
    %59 = vector.load %arg6[%c1_33, %c0_34, %c0_35] : memref<3x8x8xf32, #tpu.memory_space<vmem>>, vector<1x8x8xf32>
    %60 = vector.shape_cast %59 : vector<1x8x8xf32> to vector<8x8xf32>
    %cst_36 = arith.constant dense<0.000000e+00> : vector<8x256xf32>
    %61 = tpu.matmul %60, %55, %cst_36 {dimension_numbers = #tpu.dot_dimension_numbers<[1], [0], [0], [1], [0, 0, 1, 1], [], []>} : vector<8x8xf32>, vector<8x256xf32>, vector<8x256xf32> -> vector<8x256xf32>
    %c2_37 = arith.constant 2 : index
    %c0_38 = arith.constant 0 : index
    %c0_39 = arith.constant 0 : index
    %62 = vector.load %arg6[%c2_37, %c0_38, %c0_39] : memref<3x8x8xf32, #tpu.memory_space<vmem>>, vector<1x8x8xf32>
    %63 = vector.shape_cast %62 : vector<1x8x8xf32> to vector<8x8xf32>
    %cst_40 = arith.constant dense<0.000000e+00> : vector<8x256xf32>
    %64 = tpu.matmul %63, %55, %cst_40 {dimension_numbers = #tpu.dot_dimension_numbers<[1], [0], [0], [1], [0, 0, 1, 1], [], []>} : vector<8x8xf32>, vector<8x256xf32>, vector<8x256xf32> -> vector<8x256xf32>
    %c0_41 = arith.constant 0 : index
    %c0_42 = arith.constant 0 : index
    %65 = vector.load %arg7[%c0_41, %c0_42] : memref<8x1xf32, #tpu.memory_space<vmem>>, vector<8x1xf32>
    %66 = vector.broadcast %65 : vector<8x1xf32> to vector<8x256xf32>
    %67 = arith.addf %61, %66 : vector<8x256xf32>
    %c1_i32_43 = arith.constant 1 : i32
    %68 = tpu.dynamic_rotate %58 by %c1_i32_43 dim 1 : vector<8x256xf32>, i32 -> vector<8x256xf32>
    %cst_44 = arith.constant 0.000000e+00 : f32
    %69 = vector.broadcast %cst_44 : f32 to vector<8x256xf32>
    %70 = arith.select %22, %68, %69 : vector<8x256xi1>, vector<8x256xf32>
    %71 = arith.addf %67, %70 : vector<8x256xf32>
    %c255_i32 = arith.constant 255 : i32
    %72 = tpu.dynamic_rotate %64 by %c255_i32 dim 1 : vector<8x256xf32>, i32 -> vector<8x256xf32>
    %cst_45 = arith.constant 0.000000e+00 : f32
    %73 = vector.broadcast %cst_45 : f32 to vector<8x256xf32>
    %74 = arith.select %24, %72, %73 : vector<8x256xi1>, vector<8x256xf32>
    %75 = arith.addf %71, %74 : vector<8x256xf32>
    %cst_46 = arith.constant 0.000000e+00 : f32
    %76 = vector.broadcast %cst_46 : f32 to vector<8x256xf32>
    %77 = arith.maximumf %75, %76 : vector<8x256xf32>
    %c0_47 = arith.constant 0 : index
    %c0_48 = arith.constant 0 : index
    %78 = vector.load %arg8[%c0_47, %c0_48] : memref<32x8xf32, #tpu.memory_space<vmem>>, vector<32x8xf32>
    %cst_49 = arith.constant dense<0.000000e+00> : vector<32x256xf32>
    %79 = tpu.matmul %78, %77, %cst_49 {dimension_numbers = #tpu.dot_dimension_numbers<[1], [0], [0], [1], [0, 0, 1, 1], [], []>} : vector<32x8xf32>, vector<8x256xf32>, vector<32x256xf32> -> vector<32x256xf32>
    %c0_50 = arith.constant 0 : index
    %c0_51 = arith.constant 0 : index
    %80 = vector.load %arg9[%c0_50, %c0_51] : memref<32x1xf32, #tpu.memory_space<vmem>>, vector<32x1xf32>
    %81 = vector.broadcast %80 : vector<32x1xf32> to vector<32x256xf32>
    %82 = arith.addf %79, %81 : vector<32x256xf32>
    %c0_52 = arith.constant 0 : index
    %c0_53 = arith.constant 0 : index
    %c0_54 = arith.constant 0 : index
    %83 = vector.load %arg10[%c0_52, %c0_53, %c0_54] : memref<1x32x256xf32, #tpu.memory_space<vmem>>, vector<1x32x256xf32>
    %84 = vector.shape_cast %83 : vector<1x32x256xf32> to vector<32x256xf32>
    %85 = vector.shape_cast %82 : vector<32x256xf32> to vector<1x32x256xf32>
    tpu.vector_store %arg10[%c0_52, %c0_53, %c0_54], %85 {strides = array<i32>} : memref<1x32x256xf32, #tpu.memory_space<vmem>>, vector<1x32x256xf32>,
    return
  }
  func.func @transform_0(%arg0: i32) -> (i32, i32, i32) {
    %c0_i32 = arith.constant 0 : i32
    %c0_i32_0 = arith.constant 0 : i32
    %c0_i32_1 = arith.constant 0 : i32
    return %arg0, %c0_i32, %c0_i32_0 : i32, i32, i32
  }
  func.func @transform_1(%arg0: i32) -> (i32, i32) {
    %c0_i32 = arith.constant 0 : i32
    %c0_i32_0 = arith.constant 0 : i32
    %c0_i32_1 = arith.constant 0 : i32
    return %c0_i32, %c0_i32_0 : i32, i32
  }
  func.func @transform_2(%arg0: i32) -> (i32, i32) {
    %c0_i32 = arith.constant 0 : i32
    %c0_i32_0 = arith.constant 0 : i32
    %c0_i32_1 = arith.constant 0 : i32
    return %c0_i32, %c0_i32_0 : i32, i32
  }
  func.func @transform_3(%arg0: i32) -> (i32, i32, i32) {
    %c0_i32 = arith.constant 0 : i32
    %c0_i32_0 = arith.constant 0 : i32
    %c0_i32_1 = arith.constant 0 : i32
    %c0_i32_2 = arith.constant 0 : i32
    return %c0_i32, %c0_i32_0, %c0_i32_1 : i32, i32, i32
  }
  func.func @transform_4(%arg0: i32) -> (i32, i32) {
    %c0_i32 = arith.constant 0 : i32
    %c0_i32_0 = arith.constant 0 : i32
    %c0_i32_1 = arith.constant 0 : i32
    return %c0_i32, %c0_i32_0 : i32, i32
  }
  func.func @transform_5(%arg0: i32) -> (i32, i32, i32) {
    %c0_i32 = arith.constant 0 : i32
    %c0_i32_0 = arith.constant 0 : i32
    %c0_i32_1 = arith.constant 0 : i32
    %c0_i32_2 = arith.constant 0 : i32
    return %c0_i32, %c0_i32_0, %c0_i32_1 : i32, i32, i32
  }
  func.func @transform_6(%arg0: i32) -> (i32, i32) {
    %c0_i32 = arith.constant 0 : i32
    %c0_i32_0 = arith.constant 0 : i32
    %c0_i32_1 = arith.constant 0 : i32
    return %c0_i32, %c0_i32_0 : i32, i32
  }
  func.func @transform_7(%arg0: i32) -> (i32, i32) {
    %c0_i32 = arith.constant 0 : i32
    %c0_i32_0 = arith.constant 0 : i32
    %c0_i32_1 = arith.constant 0 : i32
    return %c0_i32, %c0_i32_0 : i32, i32
  }
  func.func @transform_8(%arg0: i32) -> (i32, i32) {
    %c0_i32 = arith.constant 0 : i32
    %c0_i32_0 = arith.constant 0 : i32
    %c0_i32_1 = arith.constant 0 : i32
    return %c0_i32, %c0_i32_0 : i32, i32
  }
  func.func @transform_9(%arg0: i32) -> (i32, i32, i32) {
    %c0_i32 = arith.constant 0 : i32
    %c0_i32_0 = arith.constant 0 : i32
    %c0_i32_1 = arith.constant 0 : i32
    return %arg0, %c0_i32, %c0_i32_0 : i32, i32, i32
  }
}

</mosaic_0001>

<llo_original>
// kernel: tpu_custom_call.1
$region0: #{tpu_custom_call.1}
  #allocation0 [shape = 'u32[]', space=smem, size = 0x4, offset = 0x4, fixed_abs, tag = 'smem constant byte address 0x4 - core index']
  #allocation1 [shape = 'u32[72,128]{1,0:T(1,128)}', space=vmem, size = 0x9000, scoped, tag = 'internal scratch']
  %s0 = inlined_call_operand.vmem [shape: f32[2,4,256], index: 0, kind: input, shape index: {}]
  %s1 = inlined_call_operand.vmem [shape: f32[8,4], index: 1, kind: input, shape index: {}]
  %s2 = inlined_call_operand.vmem [shape: f32[8,1], index: 2, kind: input, shape index: {}]
  %s3 = inlined_call_operand.vmem [shape: f32[3,8,8], index: 3, kind: input, shape index: {}]
  %s4 = inlined_call_operand.vmem [shape: f32[8,1], index: 4, kind: input, shape index: {}]
  %s5 = inlined_call_operand.vmem [shape: f32[3,8,8], index: 5, kind: input, shape index: {}]
  %s6 = inlined_call_operand.vmem [shape: f32[8,1], index: 6, kind: input, shape index: {}]
  %s7 = inlined_call_operand.vmem [shape: f32[32,8], index: 7, kind: input, shape index: {}]
  %s8 = inlined_call_operand.vmem [shape: f32[32,1], index: 8, kind: input, shape index: {}]
  %s9 = inlined_call_operand.hbm [shape: f32[2,32,256], index: 9, kind: output, shape index: {}]
  %s10 = sld [smem:[#allocation0]]
  $region69: #{tpu_custom_call.1} parent=0
    _
  %s12 = ssub.s32 1, %s10
  %s13 = scalar_select 0, %s12, %s10
  $region1: #{tpu_custom_call.1} parent=0
    #allocation2 [shape = 'u8[65536]{0}', space=vmem, size = 0x10000, scoped, tag = 'output window, operand 0']
    #allocation3 [shape = 's32[2]{0}', space=sflag, size = 0x8, scoped, tag = 'scoped memory for tpu_custom_call.1']
    %14 = vsyncpa [#allocation3], 0
    %s15 = scalar_lea.sflag [#allocation3], 1
    %16 = vsyncpa %s15, 0
    loop: start=0, step=1, limit=4
    $region2: #{tpu_custom_call.1} parent=1 // loop_pre_header
      _
    $region3: #{tpu_custom_call.1} parent=1 // loop_header
      %s18 = sphi 0, %s22
      %p19 = scmp.ge.s32.totalorder %s18, 4
      %s28 = sphi 0, %s30
      %s31 = sphi 0, %s28
      %s32 = sphi 0, %s31
      %s48 = sphi 0, %s32
      %s52 = sphi 0, %s52
      %s54 = sphi 0, %s52
      %s55 = sphi 0, %s54
      %s69 = sphi 0, %s55
      %s73 = sphi 0, %s73
      %s75 = sphi 0, %s73
      %s76 = sphi 0, %s75
      %s90 = sphi 0, %s76
      %s94 = sphi 0, %s94
      %s96 = sphi 0, %s94
      %s97 = sphi 0, %s96
      %s111 = sphi 0, %s97
      %s115 = sphi 0, %s115
      %s117 = sphi 0, %s115
      %s118 = sphi 0, %s117
      %s132 = sphi 0, %s118
      %s136 = sphi 0, %s136
      %s138 = sphi 0, %s136
      %s139 = sphi 0, %s138
      %s153 = sphi 0, %s139
      %s157 = sphi 0, %s157
      %s159 = sphi 0, %s157
      %s160 = sphi 0, %s159
      %s174 = sphi 0, %s160
      %s178 = sphi 0, %s178
      %s180 = sphi 0, %s178
      %s181 = sphi 0, %s180
      %s195 = sphi 0, %s181
      %s199 = sphi 0, %s199
      %s201 = sphi 0, %s199
      %s202 = sphi 0, %s201
      %s216 = sphi 0, %s202
      %s222 = sphi 0, %s224
      %s225 = sphi 0, %s222
      %s226 = sphi 0, %s225
      %s242 = sphi 0, %s226
    $region4: #{tpu_custom_call.1} parent=1 // loop_header_branch
      %21 = sbr.rel (%p19) target = $region8
    $region5: #{tpu_custom_call.1} parent=1 // loop_body
      %s23 = ssub.s32 %s18, 1
      %s24 = ssub.s32 %s18, 2
      %s25 = sadd.s32 %s18, 1
      %s26 = ssub.s32 %s18, %s25
      %p27 = scmp.eq.s32.totalorder %s26, 0
      %s29 = sadd.s32 %s28, 1
      %s30 = scalar_select %p27, %s28, %s29
      %p33 = pneg %p27
      %p34 = scmp.eq.s32.totalorder %s18, 1
      %p35 = por %p33, %p34
      %p36 = scmp.ne.s32.totalorder %s28, %s31
      %p37 = scmp.eq.s32.totalorder %s18, 0
      %p38 = por %p36, %p37
      %p39 = scmp.ne.s32.totalorder %s28, %s31
      %p40 = scmp.eq.s32.totalorder %s23, 1
      %p41 = por %p39, %p40
      %p42 = scmp.ne.s32.totalorder %s31, %s32
      %p43 = scmp.eq.s32.totalorder %s23, 0
      %p44 = por %p42, %p43
      %p45 = scmp.ne.s32.totalorder %s31, %s32
      %p46 = scmp.eq.s32.totalorder %s24, 1
      %p47 = por %p45, %p46
      %p49 = scmp.ne.s32.totalorder %s32, %s48
      %p50 = scmp.eq.s32.totalorder %s24, 0
      %p51 = por %p49, %p50
      %s53 = sadd.s32 %s52, 1
      %p56 = scmp.eq.s32.totalorder %s18, 1
      %p57 = scmp.ne.s32.totalorder %s52, %s54
      %p58 = scmp.eq.s32.totalorder %s18, 0
      %p59 = por %p57, %p58
      %p60 = scmp.ne.s32.totalorder %s52, %s54
      %p61 = scmp.eq.s32.totalorder %s23, 1
      %p62 = por %p60, %p61
      %p63 = scmp.ne.s32.totalorder %s54, %s55
      %p64 = scmp.eq.s32.totalorder %s23, 0
      %p65 = por %p63, %p64
      %p66 = scmp.ne.s32.totalorder %s54, %s55
      %p67 = scmp.eq.s32.totalorder %s24, 1
      %p68 = por %p66, %p67
      %p70 = scmp.ne.s32.totalorder %s55, %s69
      %p71 = scmp.eq.s32.totalorder %s24, 0
      %p72 = por %p70, %p71
      %s74 = sadd.s32 %s73, 1
      %p77 = scmp.eq.s32.totalorder %s18, 1
      %p78 = scmp.ne.s32.totalorder %s73, %s75
      %p79 = scmp.eq.s32.totalorder %s18, 0
      %p80 = por %p78, %p79
      %p81 = scmp.ne.s32.totalorder %s73, %s75
      %p82 = scmp.eq.s32.totalorder %s23, 1
      %p83 = por %p81, %p82
      %p84 = scmp.ne.s32.totalorder %s75, %s76
      %p85 = scmp.eq.s32.totalorder %s23, 0
      %p86 = por %p84, %p85
      %p87 = scmp.ne.s32.totalorder %s75, %s76
      %p88 = scmp.eq.s32.totalorder %s24, 1
      %p89 = por %p87, %p88
      %p91 = scmp.ne.s32.totalorder %s76, %s90
      %p92 = scmp.eq.s32.totalorder %s24, 0
      %p93 = por %p91, %p92
      %s95 = sadd.s32 %s94, 1
      %p98 = scmp.eq.s32.totalorder %s18, 1
      %p99 = scmp.ne.s32.totalorder %s94, %s96
      %p100 = scmp.eq.s32.totalorder %s18, 0
      %p101 = por %p99, %p100
      %p102 = scmp.ne.s32.totalorder %s94, %s96
      %p103 = scmp.eq.s32.totalorder %s23, 1
      %p104 = por %p102, %p103
      %p105 = scmp.ne.s32.totalorder %s96, %s97
      %p106 = scmp.eq.s32.totalorder %s23, 0
      %p107 = por %p105, %p106
      %p108 = scmp.ne.s32.totalorder %s96, %s97
      %p109 = scmp.eq.s32.totalorder %s24, 1
      %p110 = por %p108, %p109
      %p112 = scmp.ne.s32.totalorder %s97, %s111
      %p113 = scmp.eq.s32.totalorder %s24, 0
      %p114 = por %p112, %p113
      %s116 = sadd.s32 %s115, 1
      %p119 = scmp.eq.s32.totalorder %s18, 1
      %p120 = scmp.ne.s32.totalorder %s115, %s117
      %p121 = scmp.eq.s32.totalorder %s18, 0
      %p122 = por %p120, %p121
      %p123 = scmp.ne.s32.totalorder %s115, %s117
      %p124 = scmp.eq.s32.totalorder %s23, 1
      %p125 = por %p123, %p124
      %p126 = scmp.ne.s32.totalorder %s117, %s118
      %p127 = scmp.eq.s32.totalorder %s23, 0
      %p128 = por %p126, %p127
      %p129 = scmp.ne.s32.totalorder %s117, %s118
      %p130 = scmp.eq.s32.totalorder %s24, 1
      %p131 = por %p129, %p130
      %p133 = scmp.ne.s32.totalorder %s118, %s132
      %p134 = scmp.eq.s32.totalorder %s24, 0
      %p135 = por %p133, %p134
      %s137 = sadd.s32 %s136, 1
      %p140 = scmp.eq.s32.totalorder %s18, 1
      %p141 = scmp.ne.s32.totalorder %s136, %s138
      %p142 = scmp.eq.s32.totalorder %s18, 0
      %p143 = por %p141, %p142
      %p144 = scmp.ne.s32.totalorder %s136, %s138
      %p145 = scmp.eq.s32.totalorder %s23, 1
      %p146 = por %p144, %p145
      %p147 = scmp.ne.s32.totalorder %s138, %s139
      %p148 = scmp.eq.s32.totalorder %s23, 0
      %p149 = por %p147, %p148
      %p150 = scmp.ne.s32.totalorder %s138, %s139
      %p151 = scmp.eq.s32.totalorder %s24, 1
      %p152 = por %p150, %p151
      %p154 = scmp.ne.s32.totalorder %s139, %s153
      %p155 = scmp.eq.s32.totalorder %s24, 0
      %p156 = por %p154, %p155
      %s158 = sadd.s32 %s157, 1
      %p161 = scmp.eq.s32.totalorder %s18, 1
      %p162 = scmp.ne.s32.totalorder %s157, %s159
      %p163 = scmp.eq.s32.totalorder %s18, 0
      %p164 = por %p162, %p163
      %p165 = scmp.ne.s32.totalorder %s157, %s159
      %p166 = scmp.eq.s32.totalorder %s23, 1
      %p167 = por %p165, %p166
      %p168 = scmp.ne.s32.totalorder %s159, %s160
      %p169 = scmp.eq.s32.totalorder %s23, 0
      %p170 = por %p168, %p169
      %p171 = scmp.ne.s32.totalorder %s159, %s160
      %p172 = scmp.eq.s32.totalorder %s24, 1
      %p173 = por %p171, %p172
      %p175 = scmp.ne.s32.totalorder %s160, %s174
      %p176 = scmp.eq.s32.totalorder %s24, 0
      %p177 = por %p175, %p176
      %s179 = sadd.s32 %s178, 1
      %p182 = scmp.eq.s32.totalorder %s18, 1
      %p183 = scmp.ne.s32.totalorder %s178, %s180
      %p184 = scmp.eq.s32.totalorder %s18, 0
      %p185 = por %p183, %p184
      %p186 = scmp.ne.s32.totalorder %s178, %s180
      %p187 = scmp.eq.s32.totalorder %s23, 1
      %p188 = por %p186, %p187
      %p189 = scmp.ne.s32.totalorder %s180, %s181
      %p190 = scmp.eq.s32.totalorder %s23, 0
      %p191 = por %p189, %p190
      %p192 = scmp.ne.s32.totalorder %s180, %s181
      %p193 = scmp.eq.s32.totalorder %s24, 1
      %p194 = por %p192, %p193
      %p196 = scmp.ne.s32.totalorder %s181, %s195
      %p197 = scmp.eq.s32.totalorder %s24, 0
      %p198 = por %p196, %p197
      %s200 = sadd.s32 %s199, 1
      %p203 = scmp.eq.s32.totalorder %s18, 1
      %p204 = scmp.ne.s32.totalorder %s199, %s201
      %p205 = scmp.eq.s32.totalorder %s18, 0
      %p206 = por %p204, %p205
      %p207 = scmp.ne.s32.totalorder %s199, %s201
      %p208 = scmp.eq.s32.totalorder %s23, 1
      %p209 = por %p207, %p208
      %p210 = scmp.ne.s32.totalorder %s201, %s202
      %p211 = scmp.eq.s32.totalorder %s23, 0
      %p212 = por %p210, %p211
      %p213 = scmp.ne.s32.totalorder %s201, %s202
      %p214 = scmp.eq.s32.totalorder %s24, 1
      %p215 = por %p213, %p214
      %p217 = scmp.ne.s32.totalorder %s202, %s216
      %p218 = scmp.eq.s32.totalorder %s24, 0
      %p219 = por %p217, %p218
      %s220 = ssub.s32 %s18, %s25
      %p221 = scmp.eq.s32.totalorder %s220, 0
      %s223 = sadd.s32 %s222, 1
      %s224 = scalar_select %p221, %s222, %s223
      %p227 = pneg %p221
      %p228 = scmp.eq.s32.totalorder %s18, 1
      %p229 = por %p227, %p228
      %p230 = scmp.ne.s32.totalorder %s222, %s225
      %p231 = scmp.eq.s32.totalorder %s18, 0
      %p232 = por %p230, %p231
      %p233 = scmp.ne.s32.totalorder %s222, %s225
      %p234 = scmp.eq.s32.totalorder %s23, 1
      %p235 = por %p233, %p234
      %p236 = scmp.ne.s32.totalorder %s225, %s226
      %p237 = scmp.eq.s32.totalorder %s23, 0
      %p238 = por %p236, %p237
      %p239 = scmp.ne.s32.totalorder %s225, %s226
      %p240 = scmp.eq.s32.totalorder %s24, 1
      %p241 = por %p239, %p240
      %p243 = scmp.ne.s32.totalorder %s226, %s242
      %p244 = scmp.eq.s32.totalorder %s24, 0
      %p245 = por %p243, %p244
      %p246 = scmp.le.s32.totalorder 1, %s18
      %p247 = scmp.lt.s32.totalorder %s18, 3
      %p248 = pnand %p246, %p247
      %p249 = pneg %p248
      // Predicated region
      $region9: #{tpu_custom_call.1} parent=5 // pred_check
        _
      $region10: #{tpu_custom_call.1} parent=5 // pred_check_branch
        %251 = sbr.rel (%p248) target = $region12
      $region11: #{tpu_custom_call.1} parent=5 // pred_region
        %s252 = ssub.s32 %s18, 1
        // Predicated region
        $region13: #{tpu_custom_call.1} parent=11 // pred_check
          %p253 = pneg %p65
        $region14: #{tpu_custom_call.1} parent=11 // pred_check_branch
          %255 = sbr.rel (%p253) target = $region16
        $region15: #{tpu_custom_call.1} parent=11 // pred_region
          _
        $region16: #{tpu_custom_call.1} parent=11 // pred_fallthru
          _
        // Predicated region
        $region17: #{tpu_custom_call.1} parent=11 // pred_check
          %p256 = pneg %p86
        $region18: #{tpu_custom_call.1} parent=11 // pred_check_branch
          %258 = sbr.rel (%p256) target = $region20
        $region19: #{tpu_custom_call.1} parent=11 // pred_region
          _
        $region20: #{tpu_custom_call.1} parent=11 // pred_fallthru
          _
        // Predicated region
        $region21: #{tpu_custom_call.1} parent=11 // pred_check
          %p259 = pneg %p107
        $region22: #{tpu_custom_call.1} parent=11 // pred_check_branch
          %261 = sbr.rel (%p259) target = $region24
        $region23: #{tpu_custom_call.1} parent=11 // pred_region
          _
        $region24: #{tpu_custom_call.1} parent=11 // pred_fallthru
          _
        // Predicated region
        $region25: #{tpu_custom_call.1} parent=11 // pred_check
          %p262 = pneg %p128
        $region26: #{tpu_custom_call.1} parent=11 // pred_check_branch
          %264 = sbr.rel (%p262) target = $region28
        $region27: #{tpu_custom_call.1} parent=11 // pred_region
          _
        $region28: #{tpu_custom_call.1} parent=11 // pred_fallthru
          _
        // Predicated region
        $region29: #{tpu_custom_call.1} parent=11 // pred_check
          %p265 = pneg %p149
        $region30: #{tpu_custom_call.1} parent=11 // pred_check_branch
          %267 = sbr.rel (%p265) target = $region32
        $region31: #{tpu_custom_call.1} parent=11 // pred_region
          _
        $region32: #{tpu_custom_call.1} parent=11 // pred_fallthru
          _
        // Predicated region
        $region33: #{tpu_custom_call.1} parent=11 // pred_check
          %p268 = pneg %p170
        $region34: #{tpu_custom_call.1} parent=11 // pred_check_branch
          %270 = sbr.rel (%p268) target = $region36
        $region35: #{tpu_custom_call.1} parent=11 // pred_region
          _
        $region36: #{tpu_custom_call.1} parent=11 // pred_fallthru
          _
        // Predicated region
        $region37: #{tpu_custom_call.1} parent=11 // pred_check
          %p271 = pneg %p191
        $region38: #{tpu_custom_call.1} parent=11 // pred_check_branch
          %273 = sbr.rel (%p271) target = $region40
        $region39: #{tpu_custom_call.1} parent=11 // pred_region
          _
        $region40: #{tpu_custom_call.1} parent=11 // pred_fallthru
          _
        // Predicated region
        $region41: #{tpu_custom_call.1} parent=11 // pred_check
          %p274 = pneg %p212
        $region42: #{tpu_custom_call.1} parent=11 // pred_check_branch
          %276 = sbr.rel (%p274) target = $region44
        $region43: #{tpu_custom_call.1} parent=11 // pred_region
          _
        $region44: #{tpu_custom_call.1} parent=11 // pred_fallthru
          _
      $region12: #{tpu_custom_call.1} parent=5 // pred_fallthru
        _
      %p277 = scmp.lt.s32.totalorder %s18, 2
      // Predicated region
      $region45: #{tpu_custom_call.1} parent=5 // pred_check
        %p278 = pneg %p277
      $region46: #{tpu_custom_call.1} parent=5 // pred_check_branch
        %280 = sbr.rel (%p278) target = $region48
      $region47: #{tpu_custom_call.1} parent=5 // pred_region
        // Predicated region
        $region49: #{tpu_custom_call.1} parent=47 // pred_check
          %p281 = pneg %p38
        $region50: #{tpu_custom_call.1} parent=47 // pred_check_branch
          %283 = sbr.rel (%p281) target = $region52
        $region51: #{tpu_custom_call.1} parent=47 // pred_region
          %p284 = scmp.lt.s32.totalorder %s18, 1
          %s285 = scalar_select %p284, %s18, 1
          %s286 = smul.addr %s285, 2
          %s287 = smul.addr %s286, 4
          %s288 = scalar_lea.vmem %s0, %s287
        $region52: #{tpu_custom_call.1} parent=47 // pred_fallthru
          _
      $region48: #{tpu_custom_call.1} parent=5 // pred_fallthru
        _
      %p289 = scmp.le.s32.totalorder 1, %s18
      %p290 = scmp.lt.s32.totalorder %s18, 3
      %p291 = pnand %p289, %p290
      %p292 = pneg %p291
      // Predicated region
      $region53: #{tpu_custom_call.1} parent=5 // pred_check
        _
      $region54: #{tpu_custom_call.1} parent=5 // pred_check_branch
        %294 = sbr.rel (%p291) target = $region56
      $region55: #{tpu_custom_call.1} parent=5 // pred_region
        %s295 = ssub.s32 %s18, 1
        %p296 = scmp.lt.s32.totalorder %s23, 1
        %s297 = scalar_select %p296, %s23, 1
        %s298 = smul.addr %s297, 2
        %s299 = smul.addr %s298, 4
        %s300 = scalar_lea.vmem %s0, %s299
        %p301 = pneg %p44
        %p302 = pneg %p41
        %p303 = pneg %p65
        %p304 = pneg %p62
        %p305 = pneg %p86
        %p306 = pneg %p83
        %p307 = pneg %p107
        %p308 = pneg %p104
        %p309 = pneg %p128
        %p310 = pneg %p125
        %p311 = pneg %p149
        %p312 = pneg %p146
        %p313 = pneg %p170
        %p314 = pneg %p167
        %p315 = pneg %p191
        %p316 = pneg %p188
        %p317 = pneg %p212
        %p318 = pneg %p209
        %p319 = pneg %p238
        %p320 = pneg %p235
        %s321 = sand.u32 %s225, 1
        %s322 = scalar_lea.sflag [#allocation3], %s321
        %s323 = sand.u32 %s225, 1
        %s324 = smul.addr %s323, 64
        %s325 = scalar_lea.vmem [#allocation2], %s324
        %p326 = scmp.lt.s32.totalorder %s23, 1
        %s327 = scalar_select %p326, %s23, 1
        %s328 = smul.addr %s327, 2
        %s329 = smul.addr %s328, 4
        %s330 = scalar_lea.vmem %s0, %s329
        %v331 = vlaneseq
        %v332 = vand.u32 %v331, 127
        %v333 = vadd.s32 %v332, 128
        %vm334 = vcmp.lt.s32.totalorder %v332, 0
        %v335 = vsub.s32 0, %v332
        %v336 = vsel %vm334, %v335, %v332
        %v337 = vshrl.u32 %v336, 4
        %v338 = vand.u32 %v336, 15
        %v339 = vsub.s32 0, %v338
        %v340 = vsel %vm334, %v339, %v338
        %vm341 = vcmp.lt.s32.totalorder %v333, 0
        %v342 = vsub.s32 0, %v333
        %v343 = vsel %vm341, %v342, %v333
        %v344 = vshrl.u32 %v343, 4
        %v345 = vand.u32 %v343, 15
        %v346 = vsub.s32 0, %v345
        %v347 = vsel %vm341, %v346, %v345
        %vm348 = vcmp.ne.s32.totalorder %v340, 0
        %vm349 = vcmp.ne.s32.totalorder %v347, 0
        %vm350 = vcmp.lt.s32.totalorder %v340, 0
        %vm351 = vcmp.lt.s32.totalorder %v347, 0
        %vm352 = vmand %vm350, %vm348
        %vm353 = vmand %vm351, %vm349
        %v354 = vadd.s32 %v340, 16
        %v355 = vadd.s32 %v347, 16
        %v356 = vsel %vm352, %v354, %v340
        %v357 = vsel %vm353, %v355, %v347
        %vm358 = vcmp.ge.s32.totalorder %v332, 16
        %vm359 = vcmp.ge.s32.totalorder %v333, 16
        %vm360 = vcmp.lt.s32.totalorder %v332, 240
        %vm361 = vcmp.lt.s32.totalorder %v333, 240
        %vm362 = vcmp.ne.s32.totalorder %v356, 0
        %vm363 = vcmp.ne.s32.totalorder %v357, 0
        %vm364 = vcmp.ne.s32.totalorder %v356, 15
        %vm365 = vcmp.ne.s32.totalorder %v357, 15
        %v366 = vld [vmem:[%s330] sm:$0xff]
        %v367 = vld [vmem:[%s1] sm:$0xff]
        %v368 = vld [vmem:[%s2] sm:$0xff]
        %370 = vset.pattern.permute.xlu0 0
        %371 = vperm.xlu0 %370, %v368
        %v372 = vpop.permute.xlu0 %371
        %375 = vst [vmem:[#allocation1] ss:$2 sm:$0xff] %v366
        %v376 = vld.sshfl [vmem:[#allocation1] sm:$0xff pattern:$0x75316420]
        %v377 = vld.sshfl [vmem:[#allocation1 + $0x8] sm:$0xff pattern:$0x75316420]
        %vm378 = vcmask 31744
        %v380 = vsel %vm378, %v367, 0
        %vm382 = vcmask 1043456
        %v383 = vsel %vm382, %v376, 0
        %v385 = vsel %vm382, %v377, 0
        %387 = vmatpush.msra.mxu0 0.0
        %388 = vmatpush.msra.mxu0 0.0
        %389 = vmatpush.msra.mxu0 0.0
        %390 = vmatpush.msra.mxu0 0.0
        %391 = vmatpush.msra.mxu0 0.0
        %392 = vmatpush.msra.mxu0 0.0
        %393 = vmatpush.msra.mxu0 0.0
        %394 = vmatpush.msra.mxu0 0.0
        %395 = vmatpush.msra.mxu0 0.0
        %396 = vmatpush.msra.mxu0 0.0
        %397 = vmatpush.msra.mxu0 0.0
        %398 = vmatpush.msra.mxu0 0.0
        %399 = vmatpush.msra.mxu0 0.0
        %400 = vmatpush.msra.mxu0 0.0
        %401 = vmatpush.msra.mxu0 0.0
        %402 = vmatpush.msra.mxu0 %v383
        %403 = vmatmul.f32.gmra.mxu0 %v380
        %v404 = vpop.f32.mrf.mxu0
        %v405 = vadd.f32 %v372, %v404
        %406 = vdwg.mxu0
        %407 = vmatpush.msra.mxu0 0.0
        %408 = vmatpush.msra.mxu0 0.0
        %409 = vmatpush.msra.mxu0 0.0
        %410 = vmatpush.msra.mxu0 0.0
        %411 = vmatpush.msra.mxu0 0.0
        %412 = vmatpush.msra.mxu0 0.0
        %413 = vmatpush.msra.mxu0 0.0
        %414 = vmatpush.msra.mxu0 0.0
        %415 = vmatpush.msra.mxu0 0.0
        %416 = vmatpush.msra.mxu0 0.0
        %417 = vmatpush.msra.mxu0 0.0
        %418 = vmatpush.msra.mxu0 0.0
        %419 = vmatpush.msra.mxu0 0.0
        %420 = vmatpush.msra.mxu0 0.0
        %421 = vmatpush.msra.mxu0 0.0
        %422 = vmatpush.msra.mxu0 %v385
        %423 = vmatmul.f32.gmra.mxu0 %v380
        %v424 = vpop.f32.mrf.mxu0
        %v425 = vadd.f32 %v372, %v424
        %426 = vdwg.mxu0
        %v427 = vmax.f32 %v405, 0.0
        %v428 = vmax.f32 %v425, 0.0
        %v429 = vld [vmem:[%s3] sm:$0xff]
        %vm430 = vcmask 64512
        %v432 = vsel %vm430, %v429, 0
        %434 = vmatpush.msra.mxu0 0.0
        %435 = vmatpush.msra.mxu0 0.0
        %436 = vmatpush.msra.mxu0 0.0
        %437 = vmatpush.msra.mxu0 0.0
        %438 = vmatpush.msra.mxu0 0.0
        %439 = vmatpush.msra.mxu0 0.0
        %440 = vmatpush.msra.mxu0 0.0
        %441 = vmatpush.msra.mxu0 0.0
        %442 = vmatpush.msra.mxu0 0.0
        %443 = vmatpush.msra.mxu0 0.0
        %444 = vmatpush.msra.mxu0 0.0
        %445 = vmatpush.msra.mxu0 0.0
        %446 = vmatpush.msra.mxu0 0.0
        %447 = vmatpush.msra.mxu0 0.0
        %448 = vmatpush.msra.mxu0 0.0
        %449 = vmatpush.msra.mxu0 %v427
        %450 = vmatmul.f32.gmra.mxu0 %v432
        %v451 = vpop.f32.mrf.mxu0
        %v452 = vadd.f32 0.0, %v451
        %453 = vdwg.mxu0
        %454 = vmatpush.msra.mxu0 0.0
        %455 = vmatpush.msra.mxu0 0.0
        %456 = vmatpush.msra.mxu0 0.0
        %457 = vmatpush.msra.mxu0 0.0
        %458 = vmatpush.msra.mxu0 0.0
        %459 = vmatpush.msra.mxu0 0.0
        %460 = vmatpush.msra.mxu0 0.0
        %461 = vmatpush.msra.mxu0 0.0
        %462 = vmatpush.msra.mxu0 0.0
        %463 = vmatpush.msra.mxu0 0.0
        %464 = vmatpush.msra.mxu0 0.0
        %465 = vmatpush.msra.mxu0 0.0
        %466 = vmatpush.msra.mxu0 0.0
        %467 = vmatpush.msra.mxu0 0.0
        %468 = vmatpush.msra.mxu0 0.0
        %469 = vmatpush.msra.mxu0 %v428
        %470 = vmatmul.f32.gmra.mxu0 %v432
        %v471 = vpop.f32.mrf.mxu0
        %v472 = vadd.f32 0.0, %v471
        %473 = vdwg.mxu0
        %s474 = scalar_lea.vmem %s3, 8
        %v475 = vld [vmem:[%s474] sm:$0xff]
        %s476 = scalar_lea.vmem %s3, 16
        %v477 = vld [vmem:[%s476] sm:$0xff]
        %v479 = vsel %vm430, %v477, 0
        %481 = vmatpush.msra.mxu0 0.0
        %482 = vmatpush.msra.mxu0 0.0
        %483 = vmatpush.msra.mxu0 0.0
        %484 = vmatpush.msra.mxu0 0.0
        %485 = vmatpush.msra.mxu0 0.0
        %486 = vmatpush.msra.mxu0 0.0
        %487 = vmatpush.msra.mxu0 0.0
        %488 = vmatpush.msra.mxu0 0.0
        %489 = vmatpush.msra.mxu0 0.0
        %490 = vmatpush.msra.mxu0 0.0
        %491 = vmatpush.msra.mxu0 0.0
        %492 = vmatpush.msra.mxu0 0.0
        %493 = vmatpush.msra.mxu0 0.0
        %494 = vmatpush.msra.mxu0 0.0
        %495 = vmatpush.msra.mxu0 0.0
        %496 = vmatpush.msra.mxu0 %v427
        %497 = vmatmul.f32.gmra.mxu0 %v479
        %v498 = vpop.f32.mrf.mxu0
        %v499 = vadd.f32 0.0, %v498
        %500 = vdwg.mxu0
        %501 = vmatpush.msra.mxu0 0.0
        %502 = vmatpush.msra.mxu0 0.0
        %503 = vmatpush.msra.mxu0 0.0
        %504 = vmatpush.msra.mxu0 0.0
        %505 = vmatpush.msra.mxu0 0.0
        %506 = vmatpush.msra.mxu0 0.0
        %507 = vmatpush.msra.mxu0 0.0
        %508 = vmatpush.msra.mxu0 0.0
        %509 = vmatpush.msra.mxu0 0.0
        %510 = vmatpush.msra.mxu0 0.0
        %511 = vmatpush.msra.mxu0 0.0
        %512 = vmatpush.msra.mxu0 0.0
        %513 = vmatpush.msra.mxu0 0.0
        %514 = vmatpush.msra.mxu0 0.0
        %515 = vmatpush.msra.mxu0 0.0
        %516 = vmatpush.msra.mxu0 %v428
        %517 = vmatmul.f32.gmra.mxu0 %v479
        %v518 = vpop.f32.mrf.mxu0
        %v519 = vadd.f32 0.0, %v518
        %520 = vdwg.mxu0
        %v521 = vld [vmem:[%s4] sm:$0xff]
        %523 = vset.pattern.permute.xlu0 0
        %524 = vperm.xlu0 %523, %v521
        %v525 = vpop.permute.xlu0 %524
        %v528 = vsel %vm430, %v475, 0
        %530 = vmatpush.msra.mxu0 0.0
        %531 = vmatpush.msra.mxu0 0.0
        %532 = vmatpush.msra.mxu0 0.0
        %533 = vmatpush.msra.mxu0 0.0
        %534 = vmatpush.msra.mxu0 0.0
        %535 = vmatpush.msra.mxu0 0.0
        %536 = vmatpush.msra.mxu0 0.0
        %537 = vmatpush.msra.mxu0 0.0
        %538 = vmatpush.msra.mxu0 0.0
        %539 = vmatpush.msra.mxu0 0.0
        %540 = vmatpush.msra.mxu0 0.0
        %541 = vmatpush.msra.mxu0 0.0
        %542 = vmatpush.msra.mxu0 0.0
        %543 = vmatpush.msra.mxu0 0.0
        %544 = vmatpush.msra.mxu0 0.0
        %545 = vmatpush.msra.mxu0 %v427
        %546 = vmatmul.f32.gmra.mxu0 %v528
        %v547 = vpop.f32.mrf.mxu0
        %v548 = vadd.f32 %v525, %v547
        %549 = vdwg.mxu0
        %550 = vmatpush.msra.mxu0 0.0
        %551 = vmatpush.msra.mxu0 0.0
        %552 = vmatpush.msra.mxu0 0.0
        %553 = vmatpush.msra.mxu0 0.0
        %554 = vmatpush.msra.mxu0 0.0
        %555 = vmatpush.msra.mxu0 0.0
        %556 = vmatpush.msra.mxu0 0.0
        %557 = vmatpush.msra.mxu0 0.0
        %558 = vmatpush.msra.mxu0 0.0
        %559 = vmatpush.msra.mxu0 0.0
        %560 = vmatpush.msra.mxu0 0.0
        %561 = vmatpush.msra.mxu0 0.0
        %562 = vmatpush.msra.mxu0 0.0
        %563 = vmatpush.msra.mxu0 0.0
        %564 = vmatpush.msra.mxu0 0.0
        %565 = vmatpush.msra.mxu0 %v428
        %566 = vmatmul.f32.gmra.mxu0 %v528
        %v567 = vpop.f32.mrf.mxu0
        %v568 = vadd.f32 %v525, %v567
        %569 = vdwg.mxu0
        %570 = vrot.lane.b32.xlu0 %v452, 16
        %v571 = vpop.permute.xlu0 %570
        %572 = vrot.lane.b32.xlu0 %v472, 16
        %v573 = vpop.permute.xlu0 %572
        %vm574 = vcmp.lt.s32.totalorder %v332, 16
        %v575 = vsel %vm574, %v571, %v573
        %v576 = vsel %vm574, %v573, %v571
        %v577 = vsel %vm358, %v576, 0.0
        %v578 = vsel %vm359, %v575, 0.0
        %v579 = vadd.f32 %v548, %v577
        %v580 = vadd.f32 %v568, %v578
        %581 = vrot.lane.b32.xlu0 %v499, 112
        %v582 = vpop.permute.xlu0 %581
        %583 = vrot.lane.b32.xlu0 %v519, 112
        %v584 = vpop.permute.xlu0 %583
        %vm585 = vcmp.lt.s32.totalorder %v332, 112
        %v586 = vsel %vm585, %v582, %v584
        %v587 = vsel %vm585, %v584, %v582
        %v588 = vsel %vm360, %v586, 0.0
        %v589 = vsel %vm361, %v587, 0.0
        %v590 = vadd.f32 %v579, %v588
        %v591 = vadd.f32 %v580, %v589
        %v592 = vmax.f32 %v590, 0.0
        %v593 = vmax.f32 %v591, 0.0
        %v594 = vld [vmem:[%s5] sm:$0xff]
        %v596 = vsel %vm430, %v594, 0
        %598 = vmatpush.msra.mxu0 0.0
        %599 = vmatpush.msra.mxu0 0.0
        %600 = vmatpush.msra.mxu0 0.0
        %601 = vmatpush.msra.mxu0 0.0
        %602 = vmatpush.msra.mxu0 0.0
        %603 = vmatpush.msra.mxu0 0.0
        %604 = vmatpush.msra.mxu0 0.0
        %605 = vmatpush.msra.mxu0 0.0
        %606 = vmatpush.msra.mxu0 0.0
        %607 = vmatpush.msra.mxu0 0.0
        %608 = vmatpush.msra.mxu0 0.0
        %609 = vmatpush.msra.mxu0 0.0
        %610 = vmatpush.msra.mxu0 0.0
        %611 = vmatpush.msra.mxu0 0.0
        %612 = vmatpush.msra.mxu0 0.0
        %613 = vmatpush.msra.mxu0 %v592
        %614 = vmatmul.f32.gmra.mxu0 %v596
        %v615 = vpop.f32.mrf.mxu0
        %v616 = vadd.f32 0.0, %v615
        %617 = vdwg.mxu0
        %618 = vmatpush.msra.mxu0 0.0
        %619 = vmatpush.msra.mxu0 0.0
        %620 = vmatpush.msra.mxu0 0.0
        %621 = vmatpush.msra.mxu0 0.0
        %622 = vmatpush.msra.mxu0 0.0
        %623 = vmatpush.msra.mxu0 0.0
        %624 = vmatpush.msra.mxu0 0.0
        %625 = vmatpush.msra.mxu0 0.0
        %626 = vmatpush.msra.mxu0 0.0
        %627 = vmatpush.msra.mxu0 0.0
        %628 = vmatpush.msra.mxu0 0.0
        %629 = vmatpush.msra.mxu0 0.0
        %630 = vmatpush.msra.mxu0 0.0
        %631 = vmatpush.msra.mxu0 0.0
        %632 = vmatpush.msra.mxu0 0.0
        %633 = vmatpush.msra.mxu0 %v593
        %634 = vmatmul.f32.gmra.mxu0 %v596
        %v635 = vpop.f32.mrf.mxu0
        %v636 = vadd.f32 0.0, %v635
        %637 = vdwg.mxu0
        %s638 = scalar_lea.vmem %s5, 8
        %v639 = vld [vmem:[%s638] sm:$0xff]
        %s640 = scalar_lea.vmem %s5, 16
        %v641 = vld [vmem:[%s640] sm:$0xff]
        %v643 = vsel %vm430, %v641, 0
        %645 = vmatpush.msra.mxu0 0.0
        %646 = vmatpush.msra.mxu0 0.0
        %647 = vmatpush.msra.mxu0 0.0
        %648 = vmatpush.msra.mxu0 0.0
        %649 = vmatpush.msra.mxu0 0.0
        %650 = vmatpush.msra.mxu0 0.0
        %651 = vmatpush.msra.mxu0 0.0
        %652 = vmatpush.msra.mxu0 0.0
        %653 = vmatpush.msra.mxu0 0.0
        %654 = vmatpush.msra.mxu0 0.0
        %655 = vmatpush.msra.mxu0 0.0
        %656 = vmatpush.msra.mxu0 0.0
        %657 = vmatpush.msra.mxu0 0.0
        %658 = vmatpush.msra.mxu0 0.0
        %659 = vmatpush.msra.mxu0 0.0
        %660 = vmatpush.msra.mxu0 %v592
        %661 = vmatmul.f32.gmra.mxu0 %v643
        %v662 = vpop.f32.mrf.mxu0
        %v663 = vadd.f32 0.0, %v662
        %664 = vdwg.mxu0
        %665 = vmatpush.msra.mxu0 0.0
        %666 = vmatpush.msra.mxu0 0.0
        %667 = vmatpush.msra.mxu0 0.0
        %668 = vmatpush.msra.mxu0 0.0
        %669 = vmatpush.msra.mxu0 0.0
        %670 = vmatpush.msra.mxu0 0.0
        %671 = vmatpush.msra.mxu0 0.0
        %672 = vmatpush.msra.mxu0 0.0
        %673 = vmatpush.msra.mxu0 0.0
        %674 = vmatpush.msra.mxu0 0.0
        %675 = vmatpush.msra.mxu0 0.0
        %676 = vmatpush.msra.mxu0 0.0
        %677 = vmatpush.msra.mxu0 0.0
        %678 = vmatpush.msra.mxu0 0.0
        %679 = vmatpush.msra.mxu0 0.0
        %680 = vmatpush.msra.mxu0 %v593
        %681 = vmatmul.f32.gmra.mxu0 %v643
        %v682 = vpop.f32.mrf.mxu0
        %v683 = vadd.f32 0.0, %v682
        %684 = vdwg.mxu0
        %v685 = vld [vmem:[%s6] sm:$0xff]
        %687 = vset.pattern.permute.xlu0 0
        %688 = vperm.xlu0 %687, %v685
        %v689 = vpop.permute.xlu0 %688
        %v692 = vsel %vm430, %v639, 0
        %694 = vmatpush.msra.mxu0 0.0
        %695 = vmatpush.msra.mxu0 0.0
        %696 = vmatpush.msra.mxu0 0.0
        %697 = vmatpush.msra.mxu0 0.0
        %698 = vmatpush.msra.mxu0 0.0
        %699 = vmatpush.msra.mxu0 0.0
        %700 = vmatpush.msra.mxu0 0.0
        %701 = vmatpush.msra.mxu0 0.0
        %702 = vmatpush.msra.mxu0 0.0
        %703 = vmatpush.msra.mxu0 0.0
        %704 = vmatpush.msra.mxu0 0.0
        %705 = vmatpush.msra.mxu0 0.0
        %706 = vmatpush.msra.mxu0 0.0
        %707 = vmatpush.msra.mxu0 0.0
        %708 = vmatpush.msra.mxu0 0.0
        %709 = vmatpush.msra.mxu0 %v592
        %710 = vmatmul.f32.gmra.mxu0 %v692
        %v711 = vpop.f32.mrf.mxu0
        %v712 = vadd.f32 %v689, %v711
        %713 = vdwg.mxu0
        %714 = vmatpush.msra.mxu0 0.0
        %715 = vmatpush.msra.mxu0 0.0
        %716 = vmatpush.msra.mxu0 0.0
        %717 = vmatpush.msra.mxu0 0.0
        %718 = vmatpush.msra.mxu0 0.0
        %719 = vmatpush.msra.mxu0 0.0
        %720 = vmatpush.msra.mxu0 0.0
        %721 = vmatpush.msra.mxu0 0.0
        %722 = vmatpush.msra.mxu0 0.0
        %723 = vmatpush.msra.mxu0 0.0
        %724 = vmatpush.msra.mxu0 0.0
        %725 = vmatpush.msra.mxu0 0.0
        %726 = vmatpush.msra.mxu0 0.0
        %727 = vmatpush.msra.mxu0 0.0
        %728 = vmatpush.msra.mxu0 0.0
        %729 = vmatpush.msra.mxu0 %v593
        %730 = vmatmul.f32.gmra.mxu0 %v692
        %v731 = vpop.f32.mrf.mxu0
        %v732 = vadd.f32 %v689, %v731
        %733 = vdwg.mxu0
        %734 = vrot.lane.b32.xlu0 %v616, 1
        %v735 = vpop.permute.xlu0 %734
        %736 = vrot.lane.b32.xlu0 %v636, 1
        %v737 = vpop.permute.xlu0 %736
        %vm738 = vcmp.lt.s32.totalorder %v332, 1
        %v739 = vsel %vm738, %v735, %v737
        %v740 = vsel %vm738, %v737, %v735
        %v741 = vsel %vm362, %v740, 0.0
        %v742 = vsel %vm363, %v739, 0.0
        %v743 = vadd.f32 %v712, %v741
        %v744 = vadd.f32 %v732, %v742
        %745 = vrot.lane.b32.xlu0 %v663, 127
        %v746 = vpop.permute.xlu0 %745
        %747 = vrot.lane.b32.xlu0 %v683, 127
        %v748 = vpop.permute.xlu0 %747
        %vm749 = vcmp.lt.s32.totalorder %v332, 127
        %v750 = vsel %vm749, %v746, %v748
        %v751 = vsel %vm749, %v748, %v746
        %v752 = vsel %vm364, %v750, 0.0
        %v753 = vsel %vm365, %v751, 0.0
        %v754 = vadd.f32 %v743, %v752
        %v755 = vadd.f32 %v744, %v753
        %v756 = vmax.f32 %v754, 0.0
        %v757 = vmax.f32 %v755, 0.0
        %v758 = vld [vmem:[%s7] sm:$0xff]
        %v759 = vld [vmem:[%s7 + $0x8] sm:$0xff]
        %v760 = vld [vmem:[%s7 + $0x10] sm:$0xff]
        %v761 = vld [vmem:[%s7 + $0x18] sm:$0xff]
        %v762 = vld [vmem:[%s8] sm:$0xff]
        %v763 = vld [vmem:[%s8 + $0x8] sm:$0xff]
        %v764 = vld [vmem:[%s8 + $0x10] sm:$0xff]
        %v765 = vld [vmem:[%s8 + $0x18] sm:$0xff]
        %767 = vset.pattern.permute.xlu0 0
        %768 = vperm.xlu0 %767, %v762
        %v769 = vpop.permute.xlu0 %768
        %772 = vset.pattern.permute.xlu0 0
        %773 = vperm.xlu0 %772, %v763
        %v774 = vpop.permute.xlu0 %773
        %777 = vset.pattern.permute.xlu0 0
        %778 = vperm.xlu0 %777, %v764
        %v779 = vpop.permute.xlu0 %778
        %782 = vset.pattern.permute.xlu0 0
        %783 = vperm.xlu0 %782, %v765
        %v784 = vpop.permute.xlu0 %783
        %v787 = vsel %vm430, %v758, 0
        %v790 = vsel %vm430, %v759, 0
        %v793 = vsel %vm430, %v760, 0
        %v796 = vsel %vm430, %v761, 0
        %798 = vmatpush.msra.mxu0 0.0
        %799 = vmatpush.msra.mxu0 0.0
        %800 = vmatpush.msra.mxu0 0.0
        %801 = vmatpush.msra.mxu0 0.0
        %802 = vmatpush.msra.mxu0 0.0
        %803 = vmatpush.msra.mxu0 0.0
        %804 = vmatpush.msra.mxu0 0.0
        %805 = vmatpush.msra.mxu0 0.0
        %806 = vmatpush.msra.mxu0 0.0
        %807 = vmatpush.msra.mxu0 0.0
        %808 = vmatpush.msra.mxu0 0.0
        %809 = vmatpush.msra.mxu0 0.0
        %810 = vmatpush.msra.mxu0 0.0
        %811 = vmatpush.msra.mxu0 0.0
        %812 = vmatpush.msra.mxu0 0.0
        %813 = vmatpush.msra.mxu0 %v756
        %814 = vmatmul.f32.gmra.mxu0 %v787
        %v815 = vpop.f32.mrf.mxu0
        %v816 = vadd.f32 %v769, %v815
        %817 = vmatmul.f32.gmra.mxu0 %v790
        %v818 = vpop.f32.mrf.mxu0
        %v819 = vadd.f32 %v774, %v818
        %820 = vmatmul.f32.gmra.mxu0 %v793
        %v821 = vpop.f32.mrf.mxu0
        %v822 = vadd.f32 %v779, %v821
        %823 = vmatmul.f32.gmra.mxu0 %v796
        %v824 = vpop.f32.mrf.mxu0
        %v825 = vadd.f32 %v784, %v824
        %826 = vdwg.mxu0
        %827 = vmatpush.msra.mxu0 0.0
        %828 = vmatpush.msra.mxu0 0.0
        %829 = vmatpush.msra.mxu0 0.0
        %830 = vmatpush.msra.mxu0 0.0
        %831 = vmatpush.msra.mxu0 0.0
        %832 = vmatpush.msra.mxu0 0.0
        %833 = vmatpush.msra.mxu0 0.0
        %834 = vmatpush.msra.mxu0 0.0
        %835 = vmatpush.msra.mxu0 0.0
        %836 = vmatpush.msra.mxu0 0.0
        %837 = vmatpush.msra.mxu0 0.0
        %838 = vmatpush.msra.mxu0 0.0
        %839 = vmatpush.msra.mxu0 0.0
        %840 = vmatpush.msra.mxu0 0.0
        %841 = vmatpush.msra.mxu0 0.0
        %842 = vmatpush.msra.mxu0 %v757
        %843 = vmatmul.f32.gmra.mxu0 %v787
        %v844 = vpop.f32.mrf.mxu0
        %v845 = vadd.f32 %v769, %v844
        %846 = vmatmul.f32.gmra.mxu0 %v790
        %v847 = vpop.f32.mrf.mxu0
        %v848 = vadd.f32 %v774, %v847
        %849 = vmatmul.f32.gmra.mxu0 %v793
        %v850 = vpop.f32.mrf.mxu0
        %v851 = vadd.f32 %v779, %v850
        %852 = vmatmul.f32.gmra.mxu0 %v796
        %v853 = vpop.f32.mrf.mxu0
        %v854 = vadd.f32 %v784, %v853
        %855 = vdwg.mxu0
        %856 = vst [vmem:[%s325] sm:$0xff] %v816
        %857 = vst [vmem:[%s325 + $0x8] sm:$0xff] %v845
        %858 = vst [vmem:[%s325 + $0x10] sm:$0xff] %v819
        %859 = vst [vmem:[%s325 + $0x18] sm:$0xff] %v848
        %860 = vst [vmem:[%s325 + $0x20] sm:$0xff] %v822
        %861 = vst [vmem:[%s325 + $0x28] sm:$0xff] %v851
        %862 = vst [vmem:[%s325 + $0x30] sm:$0xff] %v825
        %863 = vst [vmem:[%s325 + $0x38] sm:$0xff] %v854
        %s864 = sand.u32 %s225, 1
        %s865 = scalar_lea.sflag [#allocation3], %s864
        %s866 = sand.u32 %s225, 1
        %s867 = smul.addr %s866, 64
        %s868 = scalar_lea.vmem [#allocation2], %s867
        // Predicated region
        $region57: #{tpu_custom_call.1} parent=55 // pred_check
          %p869 = pneg %p235
        $region58: #{tpu_custom_call.1} parent=55 // pred_check_branch
          %871 = sbr.rel (%p869) target = $region60
        $region59: #{tpu_custom_call.1} parent=55 // pred_region
          %873 = vsyncadd %s865, 0
          %s874 = smul.addr %s23, 8
          %s875 = smul.addr %s874, 8
          %s876 = scalar_lea.hbm %s9, %s875
          %s877 = sshll.u32 %s868, 4
          %s878 = int_to_ptr.vmem [resolvable:$true] %s877
          %s879 = sshll.u32 %s876, 4
          %s880 = int_to_ptr.hbm [resolvable:$true] %s879
          %885 = dma.vmem_to_hbm [thread:$0]  %s878, 1024, %s880, %s865, 256, 256, 16
        $region60: #{tpu_custom_call.1} parent=55 // pred_fallthru
          _
      $region56: #{tpu_custom_call.1} parent=5 // pred_fallthru
        _
      %p886 = scmp.le.s32.totalorder 2, %s18
      // Predicated region
      $region61: #{tpu_custom_call.1} parent=5 // pred_check
        %p887 = pneg %p886
      $region62: #{tpu_custom_call.1} parent=5 // pred_check_branch
        %889 = sbr.rel (%p887) target = $region64
      $region63: #{tpu_custom_call.1} parent=5 // pred_region
        %s890 = ssub.s32 %s18, 2
        // Predicated region
        $region65: #{tpu_custom_call.1} parent=63 // pred_check
          %p891 = pneg %p241
        $region66: #{tpu_custom_call.1} parent=63 // pred_check_branch
          %893 = sbr.rel (%p891) target = $region68
        $region67: #{tpu_custom_call.1} parent=63 // pred_region
          %s894 = sand.u32 %s226, 1
          %s895 = scalar_lea.sflag [#allocation3], %s894
          %s896 = sand.u32 %s226, 1
          %s897 = smul.addr %s896, 64
          %s898 = scalar_lea.vmem [#allocation2], %s897
          %900 = dma.done %s895, 1024
        $region68: #{tpu_custom_call.1} parent=63 // pred_fallthru
          _
      $region64: #{tpu_custom_call.1} parent=5 // pred_fallthru
        _
    $region6: #{tpu_custom_call.1} parent=1 // loop_footer
      %s22 = sadd.s32 1, %s18
    $region7: #{tpu_custom_call.1} parent=1 // loop_footer_branch
      %17 = sbr.rel target = $region3
    $region8: #{tpu_custom_call.1} parent=1 // loop_exit
      _
    %901 = vsyncpa [#allocation3], 1
    %s902 = scalar_lea.sflag [#allocation3], 1
    %903 = vsyncpa %s902, 1

</llo_original>
